<compile_context>
chip_gen: v7x
topology: tpu7x:2x2x1
jax: 0.10.0
libtpu: 0.0.40
codegen_flags: <defaults>
</compile_context>

<pallas_src>
import jax
import jax.numpy as jnp
from jax.experimental import pallas as pl
from jax.experimental.pallas import tpu as pltpu


def _round_up(n, m):
    return ((n + m - 1) // m) * m


def _choose_bm(B, bm_max):
    """Batch tile: multiple of 8, <= bm_max, and >= 2 grid steps when B >= 16
    so both TensorCores on v7x get work."""
    B8 = _round_up(max(B, 1), 8)
    n_blocks = max((B8 + bm_max - 1) // bm_max, 2 if B8 >= 16 else 1)
    return _round_up((B8 + n_blocks - 1) // n_blocks, 8)


def sll_fc_kernel(x_ref, w1t_ref, w2_ref, b_ref, o_ref):
    """x:(bm,cin_p) f32   w1t:(cin_p,cout_p) bf16   w2:(cout_p,cin_p) bf16
       b:(1,cout_p) f32   o:(bm,cin_p) f32."""
    x = x_ref[...]                                   # f32, reused for the subtract

    # h = ReLU(x @ W1t + b)   -- bf16 MXU operands, f32 accumulation.
    h = jnp.dot(x.astype(jnp.bfloat16), w1t_ref[...],
                preferred_element_type=jnp.float32) + b_ref[...]
    h = jnp.maximum(h, 0.0)                          # (bm, cout_p) f32

    # res = h @ W2            (W2 = T[:,None] * W, precomputed in wrapper)
    res = jnp.dot(h.astype(jnp.bfloat16), w2_ref[...],
                  preferred_element_type=jnp.float32)  # (bm, cin_p) f32

    o_ref[...] = (x - res).astype(o_ref.dtype)


def sll_block_fc(x, w, b, q, *, scale=1.0, epsilon=1e-6, bm=256):
    B, cin = x.shape
    cout, cin_w = w.shape
    assert cin == cin_w

    x32 = x.astype(jnp.float32)
    w = w.astype(jnp.float32)
    b = b.astype(jnp.float32)
    q = q.astype(jnp.float32)

    # ---- Grid-invariant T computation, hoisted to the wrapper (once) ----
    q_abs = jnp.abs(q)
    q_inv = 1.0 / (q_abs + epsilon)
    wwT = w @ w.T
    T = 2.0 / jnp.sum(jnp.abs(q_inv[:, None] * wwT * q_abs[None, :]), axis=1)  # (cout,)

    # Fold scale / T into the weights; pre-transpose W1; store both in bf16.
    w1t = (scale * w).T.astype(jnp.bfloat16)        # (cin, cout)
    w2 = (T[:, None] * w).astype(jnp.bfloat16)      # (cout, cin)

    # ---- Lane-dense padding + batch tiling ----
    cin_p = _round_up(cin, 128)
    cout_p = _round_up(cout, 128)
    bm_eff = _choose_bm(B, bm)
    B_p = _round_up(max(B, bm_eff), bm_eff)
    grid = B_p // bm_eff

    # Skip the extra HBM round trip for x when it is already aligned.
    needs_pad = (cin_p != cin) or (B_p != B)
    if needs_pad:
        x_p = jnp.zeros((B_p, cin_p), jnp.float32).at[:B, :cin].set(x32)
        io_aliases = {0: 0}          # x_p is a fresh temp -> safe to reuse its buffer
    else:
        x_p = x32
        io_aliases = {}              # never clobber the caller's buffer

    w1t_p = jnp.zeros((cin_p, cout_p), jnp.bfloat16).at[:cin, :cout].set(w1t)
    w2_p = jnp.zeros((cout_p, cin_p), jnp.bfloat16).at[:cout, :cin].set(w2)
    b_p = jnp.zeros((1, cout_p), jnp.float32).at[0, :cout].set(b)

    # ---- Explicit VMEM budget: single-buffered weights + double-buffered x/out ----
    weight_bytes = 2 * cout_p * cin_p * 2            # two bf16 weight matrices, 1 buffer each
    bias_bytes = cout_p * 4
    io_bytes = 2 * 2 * bm_eff * cin_p * 4            # x + out tiles, double-buffered f32
    h_bytes = bm_eff * cout_p * 4                    # intermediate activations
    vmem_bytes = int(1.5 * (weight_bytes + bias_bytes + io_bytes + h_bytes)) + (1 << 20)
    vmem_bytes = min(max(vmem_bytes, 8 << 20), 64 << 20)

    out_p = pl.pallas_call(
        sll_fc_kernel,
        out_shape=jax.ShapeDtypeStruct((B_p, cin_p), jnp.float32),
        grid_spec=pltpu.PrefetchScalarGridSpec(
            num_scalar_prefetch=0,
            grid=(grid,),
            in_specs=[
                pl.BlockSpec((bm_eff, cin_p), lambda i: (i, 0)),     # x tile (batch-tiled)
                pl.BlockSpec((cin_p, cout_p), lambda i: (0, 0),
                             pipeline_mode=pl.Buffered(1)),          # W1t  (resident)
                pl.BlockSpec((cout_p, cin_p), lambda i: (0, 0),
                             pipeline_mode=pl.Buffered(1)),          # W2   (resident)
                pl.BlockSpec((1, cout_p), lambda i: (0, 0),
                             pipeline_mode=pl.Buffered(1)),          # bias (resident)
            ],
            out_specs=pl.BlockSpec((bm_eff, cin_p), lambda i: (i, 0)),
        ),
        compiler_params=pltpu.CompilerParams(
            dimension_semantics=("parallel",),
            vmem_limit_bytes=vmem_bytes,
        ),
        input_output_aliases=io_aliases,
    )(x_p, w1t_p, w2_p, b_p)

    return out_p[:B, :cin]


def sll_block_fc_ref(x, w, b, q, *, scale=1.0, epsilon=1e-6):
    """Plain-JAX reference mirroring the PyTorch forward verbatim (f32)."""
    res = scale * x @ w.T + b
    res = jnp.maximum(res, 0.0)
    q_abs = jnp.abs(q)
    q_inv = (1.0 / (q_abs + epsilon))[:, None]
    T = 2.0 / jnp.sum(jnp.abs(q_inv * (w @ w.T) * q_abs[None, :]), axis=1)
    res = T * res
    res = res @ w
    return x - res


if __name__ == "__main__":
    B, CIN, COUT = 16, 32, 64
    scale, epsilon = 1.0, 1e-6

    key = jax.random.PRNGKey(0)
    kx, kw, kb, kq = jax.random.split(key, 4)

    # Deterministic init matching the PyTorch __init__:
    #   W: xavier-normal (cout, cin); bias: U(-1/sqrt(fan_in), 1/sqrt(fan_in)); q: U[0,1)
    xavier_std = (2.0 / (CIN + COUT)) ** 0.5
    w = xavier_std * jax.random.normal(kw, (COUT, CIN), dtype=jnp.float32)
    bound = 1.0 / (CIN ** 0.5)
    b = jax.random.uniform(kb, (COUT,), minval=-bound, maxval=bound, dtype=jnp.float32)
    q = jax.random.uniform(kq, (COUT,), dtype=jnp.float32)

    x = jax.random.normal(kx, (B, CIN), dtype=jnp.float32)

    out = sll_block_fc(x, w, b, q, scale=scale, epsilon=epsilon)
    out = jax.block_until_ready(out)

    ref = sll_block_fc_ref(x, w, b, q, scale=scale, epsilon=epsilon)
    assert out.shape == (B, CIN)
    # Tolerance accounts for bf16 MXU operands (f32 accumulation).
    assert jnp.allclose(out, ref, rtol=2e-2, atol=2e-2), "mismatch vs reference"

    print("KERNEL_OK")
</pallas_src>

<mosaic_0001>
module attributes {stable_mosaic.version = 11 : i64} {
  func.func @sll_fc_kernel(%arg0: i32, %arg1: memref<8x128xf32, #tpu.memory_space<vmem>>, %arg2: memref<128x128xbf16, #tpu.memory_space<vmem>>, %arg3: memref<128x128xbf16, #tpu.memory_space<vmem>>, %arg4: memref<1x128xf32, #tpu.memory_space<vmem>>, %arg5: memref<8x128xf32, #tpu.memory_space<vmem>>) attributes {dimension_semantics = [#tpu.dimension_semantics<parallel>], iteration_bounds = array<i64: 2>, scalar_prefetch = 0 : i64, scratch_operands = 0 : i64, tpu.core_type = #tpu.core_type<tc>, window_params = [{transform_indices = @transform_0, window_bounds = array<i64: 8, 128>}, {pipeline_mode = #tpu.pipeline_mode<synchronous>, transform_indices = @transform_1, window_bounds = array<i64: 128, 128>}, {pipeline_mode = #tpu.pipeline_mode<synchronous>, transform_indices = @transform_2, window_bounds = array<i64: 128, 128>}, {pipeline_mode = #tpu.pipeline_mode<synchronous>, transform_indices = @transform_3, window_bounds = array<i64: 1, 128>}, {transform_indices = @transform_4, window_bounds = array<i64: 8, 128>}]} {
    %c0 = arith.constant 0 : index
    %c0_0 = arith.constant 0 : index
    %0 = vector.load %arg1[%c0, %c0_0] : memref<8x128xf32, #tpu.memory_space<vmem>>, vector<8x128xf32>
    %1 = arith.truncf %0 : vector<8x128xf32> to vector<8x128xbf16>
    %c0_1 = arith.constant 0 : index
    %c0_2 = arith.constant 0 : index
    %2 = vector.load %arg2[%c0_1, %c0_2] : memref<128x128xbf16, #tpu.memory_space<vmem>>, vector<128x128xbf16>
    %cst = arith.constant dense<0.000000e+00> : vector<8x128xf32>
    %3 = tpu.matmul %1, %2, %cst {dimension_numbers = #tpu.dot_dimension_numbers<[1], [0], [0], [1], [0, 0, 1, 1], [], []>} : vector<8x128xbf16>, vector<128x128xbf16>, vector<8x128xf32> -> vector<8x128xf32>
    %c0_3 = arith.constant 0 : index
    %c0_4 = arith.constant 0 : index
    %4 = vector.load %arg4[%c0_3, %c0_4] : memref<1x128xf32, #tpu.memory_space<vmem>>, vector<1x128xf32>
    %5 = vector.broadcast %4 : vector<1x128xf32> to vector<8x128xf32>
    %6 = arith.addf %3, %5 : vector<8x128xf32>
    %cst_5 = arith.constant 0.000000e+00 : f32
    %7 = vector.broadcast %cst_5 : f32 to vector<8x128xf32>
    %8 = arith.maximumf %6, %7 : vector<8x128xf32>
    %9 = arith.truncf %8 : vector<8x128xf32> to vector<8x128xbf16>
    %c0_6 = arith.constant 0 : index
    %c0_7 = arith.constant 0 : index
    %10 = vector.load %arg3[%c0_6, %c0_7] : memref<128x128xbf16, #tpu.memory_space<vmem>>, vector<128x128xbf16>
    %cst_8 = arith.constant dense<0.000000e+00> : vector<8x128xf32>
    %11 = tpu.matmul %9, %10, %cst_8 {dimension_numbers = #tpu.dot_dimension_numbers<[1], [0], [0], [1], [0, 0, 1, 1], [], []>} : vector<8x128xbf16>, vector<128x128xbf16>, vector<8x128xf32> -> vector<8x128xf32>
    %12 = arith.subf %0, %11 : vector<8x128xf32>
    %c0_9 = arith.constant 0 : index
    %c0_10 = arith.constant 0 : index
    %13 = vector.load %arg5[%c0_9, %c0_10] : memref<8x128xf32, #tpu.memory_space<vmem>>, vector<8x128xf32>
    tpu.vector_store %arg5[%c0_9, %c0_10], %12 {strides = array<i32>} : memref<8x128xf32, #tpu.memory_space<vmem>>, vector<8x128xf32>,
    return
  }
  func.func @transform_0(%arg0: i32) -> (i32, i32) {
    %c0_i32 = arith.constant 0 : i32
    %c0_i32_0 = arith.constant 0 : i32
    return %arg0, %c0_i32 : i32, i32
  }
  func.func @transform_1(%arg0: i32) -> (i32, i32) {
    %c0_i32 = arith.constant 0 : i32
    %c0_i32_0 = arith.constant 0 : i32
    %c0_i32_1 = arith.constant 0 : i32
    return %c0_i32, %c0_i32_0 : i32, i32
  }
  func.func @transform_2(%arg0: i32) -> (i32, i32) {
    %c0_i32 = arith.constant 0 : i32
    %c0_i32_0 = arith.constant 0 : i32
    %c0_i32_1 = arith.constant 0 : i32
    return %c0_i32, %c0_i32_0 : i32, i32
  }
  func.func @transform_3(%arg0: i32) -> (i32, i32) {
    %c0_i32 = arith.constant 0 : i32
    %c0_i32_0 = arith.constant 0 : i32
    %c0_i32_1 = arith.constant 0 : i32
    return %c0_i32, %c0_i32_0 : i32, i32
  }
  func.func @transform_4(%arg0: i32) -> (i32, i32) {
    %c0_i32 = arith.constant 0 : i32
    %c0_i32_0 = arith.constant 0 : i32
    return %arg0, %c0_i32 : i32, i32
  }
}

</mosaic_0001>

<llo_original>
// kernel: tpu_custom_call.1
$region0: #{tpu_custom_call.1}
  #allocation0 [shape = 'u32[]', space=smem, size = 0x4, offset = 0x4, fixed_abs, tag = 'smem constant byte address 0x4 - core index']
  #allocation1 [shape = 'u32[144,128]{1,0:T(1,128)}', space=vmem, size = 0x12000, scoped, tag = 'internal scratch']
  %s0 = inlined_call_operand.hbm [shape: f32[16,128], index: 0, kind: input, shape index: {}, may-alias: {0,4}]
  %s1 = inlined_call_operand.hbm [shape: bf16[128,128], index: 1, kind: input, shape index: {}]
  %s2 = inlined_call_operand.hbm [shape: bf16[128,128], index: 2, kind: input, shape index: {}]
  %s3 = inlined_call_operand.vmem [shape: f32[1,128], index: 3, kind: input, shape index: {}]
  %s4 = inlined_call_operand.hbm [shape: f32[16,128], index: 4, kind: output, shape index: {}, may-alias: {0,4}]
  %s5 = sld [smem:[#allocation0]]
  $region61: #{tpu_custom_call.1} parent=0
    _
  %s7 = ssub.s32 1, %s5
  %s8 = scalar_select 0, %s7, %s5
  $region1: #{tpu_custom_call.1} parent=0
    #allocation2 [shape = 'u8[8192]{0}', space=vmem, size = 0x2000, scoped, tag = 'input window, operand 0']
    #allocation3 [shape = 's32[2]{0}', space=sflag, size = 0x8, scoped, tag = 'scoped memory for tpu_custom_call.1']
    #allocation4 [shape = 's32[2]{0}', space=sflag, size = 0x8, scoped, tag = 'scoped memory for tpu_custom_call.1']
    #allocation5 [shape = 'u8[32768]{0}', space=vmem, size = 0x8000, scoped, tag = 'input window, operand 1, single buffered']
    #allocation6 [shape = 's32[1]{0}', space=sflag, size = 0x4, scoped, tag = 'scoped memory for tpu_custom_call.1']
    #allocation7 [shape = 'u8[32768]{0}', space=vmem, size = 0x8000, scoped, tag = 'input window, operand 2, single buffered']
    #allocation8 [shape = 'u8[8192]{0}', space=vmem, size = 0x2000, scoped, tag = 'output window, operand 0']
    %9 = vsyncpa [#allocation3], 0
    %s10 = scalar_lea.sflag [#allocation3], 1
    %11 = vsyncpa %s10, 0
    %12 = vsyncpa [#allocation6], 0
    %13 = vsyncpa [#allocation4], 0
    %s14 = scalar_lea.sflag [#allocation4], 1
    %15 = vsyncpa %s14, 0
    loop: start=0, step=1, limit=4
    $region2: #{tpu_custom_call.1} parent=1 // loop_pre_header
      _
    $region3: #{tpu_custom_call.1} parent=1 // loop_header
      %s17 = sphi 0, %s21
      %p18 = scmp.ge.s32.totalorder %s17, 4
      %s27 = sphi 0, %s29
      %s30 = sphi 0, %s27
      %s31 = sphi 0, %s30
      %s47 = sphi 0, %s31
      %s51 = sphi 0, %s51
      %s53 = sphi 0, %s51
      %s54 = sphi 0, %s53
      %s68 = sphi 0, %s54
      %s72 = sphi 0, %s72
      %s74 = sphi 0, %s72
      %s75 = sphi 0, %s74
      %s89 = sphi 0, %s75
      %s93 = sphi 0, %s93
      %s95 = sphi 0, %s93
      %s96 = sphi 0, %s95
      %s110 = sphi 0, %s96
      %s116 = sphi 0, %s118
      %s119 = sphi 0, %s116
      %s120 = sphi 0, %s119
      %s136 = sphi 0, %s120
    $region4: #{tpu_custom_call.1} parent=1 // loop_header_branch
      %20 = sbr.rel (%p18) target = $region8
    $region5: #{tpu_custom_call.1} parent=1 // loop_body
      %s22 = ssub.s32 %s17, 1
      %s23 = ssub.s32 %s17, 2
      %s24 = sadd.s32 %s17, 1
      %s25 = ssub.s32 %s17, %s24
      %p26 = scmp.eq.s32.totalorder %s25, 0
      %s28 = sadd.s32 %s27, 1
      %s29 = scalar_select %p26, %s27, %s28
      %p32 = pneg %p26
      %p33 = scmp.eq.s32.totalorder %s17, 1
      %p34 = por %p32, %p33
      %p35 = scmp.ne.s32.totalorder %s27, %s30
      %p36 = scmp.eq.s32.totalorder %s17, 0
      %p37 = por %p35, %p36
      %p38 = scmp.ne.s32.totalorder %s27, %s30
      %p39 = scmp.eq.s32.totalorder %s22, 1
      %p40 = por %p38, %p39
      %p41 = scmp.ne.s32.totalorder %s30, %s31
      %p42 = scmp.eq.s32.totalorder %s22, 0
      %p43 = por %p41, %p42
      %p44 = scmp.ne.s32.totalorder %s30, %s31
      %p45 = scmp.eq.s32.totalorder %s23, 1
      %p46 = por %p44, %p45
      %p48 = scmp.ne.s32.totalorder %s31, %s47
      %p49 = scmp.eq.s32.totalorder %s23, 0
      %p50 = por %p48, %p49
      %s52 = sadd.s32 %s51, 1
      %p55 = scmp.eq.s32.totalorder %s17, 1
      %p56 = scmp.ne.s32.totalorder %s51, %s53
      %p57 = scmp.eq.s32.totalorder %s17, 0
      %p58 = por %p56, %p57
      %p59 = scmp.ne.s32.totalorder %s51, %s53
      %p60 = scmp.eq.s32.totalorder %s22, 1
      %p61 = por %p59, %p60
      %p62 = scmp.ne.s32.totalorder %s53, %s54
      %p63 = scmp.eq.s32.totalorder %s22, 0
      %p64 = por %p62, %p63
      %p65 = scmp.ne.s32.totalorder %s53, %s54
      %p66 = scmp.eq.s32.totalorder %s23, 1
      %p67 = por %p65, %p66
      %p69 = scmp.ne.s32.totalorder %s54, %s68
      %p70 = scmp.eq.s32.totalorder %s23, 0
      %p71 = por %p69, %p70
      %s73 = sadd.s32 %s72, 1
      %p76 = scmp.eq.s32.totalorder %s17, 1
      %p77 = scmp.ne.s32.totalorder %s72, %s74
      %p78 = scmp.eq.s32.totalorder %s17, 0
      %p79 = por %p77, %p78
      %p80 = scmp.ne.s32.totalorder %s72, %s74
      %p81 = scmp.eq.s32.totalorder %s22, 1
      %p82 = por %p80, %p81
      %p83 = scmp.ne.s32.totalorder %s74, %s75
      %p84 = scmp.eq.s32.totalorder %s22, 0
      %p85 = por %p83, %p84
      %p86 = scmp.ne.s32.totalorder %s74, %s75
      %p87 = scmp.eq.s32.totalorder %s23, 1
      %p88 = por %p86, %p87
      %p90 = scmp.ne.s32.totalorder %s75, %s89
      %p91 = scmp.eq.s32.totalorder %s23, 0
      %p92 = por %p90, %p91
      %s94 = sadd.s32 %s93, 1
      %p97 = scmp.eq.s32.totalorder %s17, 1
      %p98 = scmp.ne.s32.totalorder %s93, %s95
      %p99 = scmp.eq.s32.totalorder %s17, 0
      %p100 = por %p98, %p99
      %p101 = scmp.ne.s32.totalorder %s93, %s95
      %p102 = scmp.eq.s32.totalorder %s22, 1
      %p103 = por %p101, %p102
      %p104 = scmp.ne.s32.totalorder %s95, %s96
      %p105 = scmp.eq.s32.totalorder %s22, 0
      %p106 = por %p104, %p105
      %p107 = scmp.ne.s32.totalorder %s95, %s96
      %p108 = scmp.eq.s32.totalorder %s23, 1
      %p109 = por %p107, %p108
      %p111 = scmp.ne.s32.totalorder %s96, %s110
      %p112 = scmp.eq.s32.totalorder %s23, 0
      %p113 = por %p111, %p112
      %s114 = ssub.s32 %s17, %s24
      %p115 = scmp.eq.s32.totalorder %s114, 0
      %s117 = sadd.s32 %s116, 1
      %s118 = scalar_select %p115, %s116, %s117
      %p121 = pneg %p115
      %p122 = scmp.eq.s32.totalorder %s17, 1
      %p123 = por %p121, %p122
      %p124 = scmp.ne.s32.totalorder %s116, %s119
      %p125 = scmp.eq.s32.totalorder %s17, 0
      %p126 = por %p124, %p125
      %p127 = scmp.ne.s32.totalorder %s116, %s119
      %p128 = scmp.eq.s32.totalorder %s22, 1
      %p129 = por %p127, %p128
      %p130 = scmp.ne.s32.totalorder %s119, %s120
      %p131 = scmp.eq.s32.totalorder %s22, 0
      %p132 = por %p130, %p131
      %p133 = scmp.ne.s32.totalorder %s119, %s120
      %p134 = scmp.eq.s32.totalorder %s23, 1
      %p135 = por %p133, %p134
      %p137 = scmp.ne.s32.totalorder %s120, %s136
      %p138 = scmp.eq.s32.totalorder %s23, 0
      %p139 = por %p137, %p138
      %p140 = scmp.le.s32.totalorder 1, %s17
      %p141 = scmp.lt.s32.totalorder %s17, 3
      %p142 = pnand %p140, %p141
      %p143 = pneg %p142
      // Predicated region
      $region9: #{tpu_custom_call.1} parent=5 // pred_check
        _
      $region10: #{tpu_custom_call.1} parent=5 // pred_check_branch
        %145 = sbr.rel (%p142) target = $region12
      $region11: #{tpu_custom_call.1} parent=5 // pred_region
        %s146 = ssub.s32 %s17, 1
        // Predicated region
        $region13: #{tpu_custom_call.1} parent=11 // pred_check
          %p147 = pneg %p64
        $region14: #{tpu_custom_call.1} parent=11 // pred_check_branch
          %149 = sbr.rel (%p147) target = $region16
        $region15: #{tpu_custom_call.1} parent=11 // pred_region
          %s151 = ssub.s32 1024, 1024
          %152 = vsyncadd [#allocation6], %s151
          %s153 = sshll.u32 [#allocation5], 4
          %s154 = int_to_ptr.vmem [resolvable:$true] %s153
          %159 = dma.hbm_to_vmem [thread:$0]  %s1, 1024, %s154, [#allocation6], 64, 64, 4
        $region16: #{tpu_custom_call.1} parent=11 // pred_fallthru
          _
        // Predicated region
        $region17: #{tpu_custom_call.1} parent=11 // pred_check
          %p160 = pneg %p85
        $region18: #{tpu_custom_call.1} parent=11 // pred_check_branch
          %162 = sbr.rel (%p160) target = $region20
        $region19: #{tpu_custom_call.1} parent=11 // pred_region
          %s164 = ssub.s32 1024, 1024
          %165 = vsyncadd [#allocation6], %s164
          %s166 = sshll.u32 [#allocation7], 4
          %s167 = int_to_ptr.vmem [resolvable:$true] %s166
          %172 = dma.hbm_to_vmem [thread:$0]  %s2, 1024, %s167, [#allocation6], 64, 64, 4
        $region20: #{tpu_custom_call.1} parent=11 // pred_fallthru
          _
        // Predicated region
        $region21: #{tpu_custom_call.1} parent=11 // pred_check
          %p173 = pneg %p106
        $region22: #{tpu_custom_call.1} parent=11 // pred_check_branch
          %175 = sbr.rel (%p173) target = $region24
        $region23: #{tpu_custom_call.1} parent=11 // pred_region
          _
        $region24: #{tpu_custom_call.1} parent=11 // pred_fallthru
          _
      $region12: #{tpu_custom_call.1} parent=5 // pred_fallthru
        _
      %p176 = scmp.lt.s32.totalorder %s17, 2
      // Predicated region
      $region25: #{tpu_custom_call.1} parent=5 // pred_check
        %p177 = pneg %p176
      $region26: #{tpu_custom_call.1} parent=5 // pred_check_branch
        %179 = sbr.rel (%p177) target = $region28
      $region27: #{tpu_custom_call.1} parent=5 // pred_region
        // Predicated region
        $region29: #{tpu_custom_call.1} parent=27 // pred_check
          %p180 = pneg %p37
        $region30: #{tpu_custom_call.1} parent=27 // pred_check_branch
          %182 = sbr.rel (%p180) target = $region32
        $region31: #{tpu_custom_call.1} parent=27 // pred_region
          %s183 = sand.u32 %s27, 1
          %s184 = scalar_lea.sflag [#allocation3], %s183
          %s185 = sand.u32 %s27, 1
          %s186 = smul.addr %s185, 8
          %s187 = scalar_lea.vmem [#allocation2], %s186
          %s189 = ssub.s32 128, 128
          %190 = vsyncadd %s184, %s189
          %s191 = smul.addr %s17, 128
          %s192 = scalar_lea.hbm %s0, %s191
          %s194 = sshll.u32 %s187, 4
          %s195 = int_to_ptr.vmem [resolvable:$true] %s194
          %197 = dma.hbm_to_vmem [thread:$0]  %s192, 128, %s195, %s184
        $region32: #{tpu_custom_call.1} parent=27 // pred_fallthru
          _
      $region28: #{tpu_custom_call.1} parent=5 // pred_fallthru
        _
      %p198 = scmp.le.s32.totalorder 1, %s17
      %p199 = scmp.lt.s32.totalorder %s17, 3
      %p200 = pnand %p198, %p199
      %p201 = pneg %p200
      // Predicated region
      $region33: #{tpu_custom_call.1} parent=5 // pred_check
        _
      $region34: #{tpu_custom_call.1} parent=5 // pred_check_branch
        %203 = sbr.rel (%p200) target = $region36
      $region35: #{tpu_custom_call.1} parent=5 // pred_region
        %s204 = ssub.s32 %s17, 1
        %s205 = sand.u32 %s30, 1
        %s206 = scalar_lea.sflag [#allocation3], %s205
        %s207 = sand.u32 %s30, 1
        %s208 = smul.addr %s207, 8
        %s209 = scalar_lea.vmem [#allocation2], %s208
        // Predicated region
        $region37: #{tpu_custom_call.1} parent=35 // pred_check
          %p210 = pneg %p43
        $region38: #{tpu_custom_call.1} parent=35 // pred_check_branch
          %212 = sbr.rel (%p210) target = $region40
        $region39: #{tpu_custom_call.1} parent=35 // pred_region
          %213 = dma.done %s206, 128
        $region40: #{tpu_custom_call.1} parent=35 // pred_fallthru
          _
        // Predicated region
        $region41: #{tpu_custom_call.1} parent=35 // pred_check
          %p214 = pneg %p64
        $region42: #{tpu_custom_call.1} parent=35 // pred_check_branch
          %216 = sbr.rel (%p214) target = $region44
        $region43: #{tpu_custom_call.1} parent=35 // pred_region
          %217 = dma.done [#allocation6], 1024
        $region44: #{tpu_custom_call.1} parent=35 // pred_fallthru
          _
        // Predicated region
        $region45: #{tpu_custom_call.1} parent=35 // pred_check
          %p218 = pneg %p85
        $region46: #{tpu_custom_call.1} parent=35 // pred_check_branch
          %220 = sbr.rel (%p218) target = $region48
        $region47: #{tpu_custom_call.1} parent=35 // pred_region
          %221 = dma.done [#allocation6], 1024
        $region48: #{tpu_custom_call.1} parent=35 // pred_fallthru
          _
        %s222 = sand.u32 %s30, 1
        %s223 = scalar_lea.sflag [#allocation3], %s222
        %s224 = sand.u32 %s30, 1
        %s225 = smul.addr %s224, 8
        %s226 = scalar_lea.vmem [#allocation2], %s225
        %p227 = pneg %p43
        %p228 = pneg %p40
        %p229 = pneg %p64
        %p230 = pneg %p61
        %p231 = pneg %p85
        %p232 = pneg %p82
        %p233 = pneg %p106
        %p234 = pneg %p103
        %p235 = pneg %p132
        %p236 = pneg %p129
        %s237 = sand.u32 %s119, 1
        %s238 = scalar_lea.sflag [#allocation4], %s237
        %s239 = sand.u32 %s119, 1
        %s240 = smul.addr %s239, 8
        %s241 = scalar_lea.vmem [#allocation8], %s240
        %v243 = vld [vmem:[%s209] sm:$0xff]
        %v244 = vpack.c.bf16 %v243, %v243
        %v245 = vld [vmem:[#allocation5] sm:$0xf]
        %v246 = vld [vmem:[#allocation5 + $0x4] sm:$0xf]
        %v247 = vld [vmem:[#allocation5 + $0x8] sm:$0xf]
        %v248 = vld [vmem:[#allocation5 + $0xc] sm:$0xf]
        %v249 = vld [vmem:[#allocation5 + $0x10] sm:$0xf]
        %v250 = vld [vmem:[#allocation5 + $0x14] sm:$0xf]
        %v251 = vld [vmem:[#allocation5 + $0x18] sm:$0xf]
        %v252 = vld [vmem:[#allocation5 + $0x1c] sm:$0xf]
        %v253 = vld [vmem:[#allocation5 + $0x20] sm:$0xf]
        %v254 = vld [vmem:[#allocation5 + $0x24] sm:$0xf]
        %v255 = vld [vmem:[#allocation5 + $0x28] sm:$0xf]
        %v256 = vld [vmem:[#allocation5 + $0x2c] sm:$0xf]
        %v257 = vld [vmem:[#allocation5 + $0x30] sm:$0xf]
        %v258 = vld [vmem:[#allocation5 + $0x34] sm:$0xf]
        %v259 = vld [vmem:[#allocation5 + $0x38] sm:$0xf]
        %v260 = vld [vmem:[#allocation5 + $0x3c] sm:$0xf]
        %v261 = vld [vmem:[%s3] sm:$0x1]
        %v263 = vlaneseq
        %v264 = vshrl.u32 %v263, 7
        %v265 = vsub.s32 0, %v264
        %v266 = vrot.slane %v261, %v265
        %v284 = vunpack.c.l.b16 %v245
        %v285 = vunpack.c.l.b16 %v246
        %v286 = vunpack.c.l.b16 %v247
        %v287 = vunpack.c.l.b16 %v248
        %v288 = vunpack.c.l.b16 %v249
        %v289 = vunpack.c.l.b16 %v250
        %v290 = vunpack.c.l.b16 %v251
        %v291 = vunpack.c.l.b16 %v252
        %v292 = vunpack.c.l.b16 %v253
        %v293 = vunpack.c.l.b16 %v254
        %v294 = vunpack.c.l.b16 %v255
        %v295 = vunpack.c.l.b16 %v256
        %v296 = vunpack.c.l.b16 %v257
        %v297 = vunpack.c.l.b16 %v258
        %v298 = vunpack.c.l.b16 %v259
        %v299 = vunpack.c.l.b16 %v260
        %v300 = vpack.c.b16 %v285, %v284
        %v301 = vpack.c.b16 %v287, %v286
        %v302 = vpack.c.b16 %v289, %v288
        %v303 = vpack.c.b16 %v291, %v290
        %v304 = vpack.c.b16 %v293, %v292
        %v305 = vpack.c.b16 %v295, %v294
        %v306 = vpack.c.b16 %v297, %v296
        %v307 = vpack.c.b16 %v299, %v298
        %316 = vmatprep.subr.bf16.mxu0 0
        %317 = vmatpush1.bf16.msra.mxu0 %v300
        %318 = vmatprep.subr.bf16.mxu0 0
        %319 = vmatpush1.bf16.msra.mxu0 %v301
        %320 = vmatprep.subr.bf16.mxu0 0
        %321 = vmatpush1.bf16.msra.mxu0 %v302
        %322 = vmatprep.subr.bf16.mxu0 0
        %323 = vmatpush1.bf16.msra.mxu0 %v303
        %324 = vmatprep.subr.bf16.mxu0 0
        %325 = vmatpush1.bf16.msra.mxu0 %v304
        %326 = vmatprep.subr.bf16.mxu0 0
        %327 = vmatpush1.bf16.msra.mxu0 %v305
        %328 = vmatprep.subr.bf16.mxu0 0
        %329 = vmatpush1.bf16.msra.mxu0 %v306
        %330 = vmatprep.subr.bf16.mxu0 0
        %331 = vmatpush1.bf16.msra.mxu0 %v307
        %332 = vmatprep.subr.bf16.mxu0 0
        %333 = vmatpush1.bf16.msra.mxu0 0
        %334 = vmatprep.subr.bf16.mxu0 0
        %335 = vmatpush1.bf16.msra.mxu0 0
        %336 = vmatprep.subr.bf16.mxu0 0
        %337 = vmatpush1.bf16.msra.mxu0 0
        %338 = vmatprep.subr.bf16.mxu0 0
        %339 = vmatpush1.bf16.msra.mxu0 0
        %340 = vmatprep.subr.bf16.mxu0 0
        %341 = vmatpush1.bf16.msra.mxu0 0
        %342 = vmatprep.subr.bf16.mxu0 0
        %343 = vmatpush1.bf16.msra.mxu0 0
        %344 = vmatprep.subr.bf16.mxu0 0
        %345 = vmatpush1.bf16.msra.mxu0 0
        %346 = vmatprep.subr.bf16.mxu0 0
        %347 = vmatpush1.bf16.msra.mxu0 0
        %348 = vmatprep.mubr.bf16.mxu0 0
        %349 = vmatmul.mubr.bf16.gmra.mrb[0].mxu0 %v244
        %v350 = vpop.f32.mrb[0].mxu0
        %v351 = vadd.f32 %v266, %v350
        %v352 = vpop.f32.mrb[0].mxu0
        %v353 = vpop.f32.mrb[0].mxu0
        %v354 = vpop.f32.mrb[0].mxu0
        %355 = vdwg.mxu0
        %v356 = vmax.f32 %v351, 0.0
        %v357 = vpack.c.bf16 %v356, %v356
        %v358 = vld [vmem:[#allocation7] sm:$0xf]
        %v359 = vld [vmem:[#allocation7 + $0x4] sm:$0xf]
        %v360 = vld [vmem:[#allocation7 + $0x8] sm:$0xf]
        %v361 = vld [vmem:[#allocation7 + $0xc] sm:$0xf]
        %v362 = vld [vmem:[#allocation7 + $0x10] sm:$0xf]
        %v363 = vld [vmem:[#allocation7 + $0x14] sm:$0xf]
        %v364 = vld [vmem:[#allocation7 + $0x18] sm:$0xf]
        %v365 = vld [vmem:[#allocation7 + $0x1c] sm:$0xf]
        %v366 = vld [vmem:[#allocation7 + $0x20] sm:$0xf]
        %v367 = vld [vmem:[#allocation7 + $0x24] sm:$0xf]
        %v368 = vld [vmem:[#allocation7 + $0x28] sm:$0xf]
        %v369 = vld [vmem:[#allocation7 + $0x2c] sm:$0xf]
        %v370 = vld [vmem:[#allocation7 + $0x30] sm:$0xf]
        %v371 = vld [vmem:[#allocation7 + $0x34] sm:$0xf]
        %v372 = vld [vmem:[#allocation7 + $0x38] sm:$0xf]
        %v373 = vld [vmem:[#allocation7 + $0x3c] sm:$0xf]
        %v390 = vunpack.c.l.b16 %v358
        %v391 = vunpack.c.l.b16 %v359
        %v392 = vunpack.c.l.b16 %v360
        %v393 = vunpack.c.l.b16 %v361
        %v394 = vunpack.c.l.b16 %v362
        %v395 = vunpack.c.l.b16 %v363
        %v396 = vunpack.c.l.b16 %v364
        %v397 = vunpack.c.l.b16 %v365
        %v398 = vunpack.c.l.b16 %v366
        %v399 = vunpack.c.l.b16 %v367
        %v400 = vunpack.c.l.b16 %v368
        %v401 = vunpack.c.l.b16 %v369
        %v402 = vunpack.c.l.b16 %v370
        %v403 = vunpack.c.l.b16 %v371
        %v404 = vunpack.c.l.b16 %v372
        %v405 = vunpack.c.l.b16 %v373
        %v406 = vpack.c.b16 %v391, %v390
        %v407 = vpack.c.b16 %v393, %v392
        %v408 = vpack.c.b16 %v395, %v394
        %v409 = vpack.c.b16 %v397, %v396
        %v410 = vpack.c.b16 %v399, %v398
        %v411 = vpack.c.b16 %v401, %v400
        %v412 = vpack.c.b16 %v403, %v402
        %v413 = vpack.c.b16 %v405, %v404
        %422 = vmatprep.subr.bf16.mxu0 0
        %423 = vmatpush1.bf16.msra.mxu0 %v406
        %424 = vmatprep.subr.bf16.mxu0 0
        %425 = vmatpush1.bf16.msra.mxu0 %v407
        %426 = vmatprep.subr.bf16.mxu0 0
        %427 = vmatpush1.bf16.msra.mxu0 %v408
        %428 = vmatprep.subr.bf16.mxu0 0
        %429 = vmatpush1.bf16.msra.mxu0 %v409
        %430 = vmatprep.subr.bf16.mxu0 0
        %431 = vmatpush1.bf16.msra.mxu0 %v410
        %432 = vmatprep.subr.bf16.mxu0 0
        %433 = vmatpush1.bf16.msra.mxu0 %v411
        %434 = vmatprep.subr.bf16.mxu0 0
        %435 = vmatpush1.bf16.msra.mxu0 %v412
        %436 = vmatprep.subr.bf16.mxu0 0
        %437 = vmatpush1.bf16.msra.mxu0 %v413
        %438 = vmatprep.subr.bf16.mxu0 0
        %439 = vmatpush1.bf16.msra.mxu0 0
        %440 = vmatprep.subr.bf16.mxu0 0
        %441 = vmatpush1.bf16.msra.mxu0 0
        %442 = vmatprep.subr.bf16.mxu0 0
        %443 = vmatpush1.bf16.msra.mxu0 0
        %444 = vmatprep.subr.bf16.mxu0 0
        %445 = vmatpush1.bf16.msra.mxu0 0
        %446 = vmatprep.subr.bf16.mxu0 0
        %447 = vmatpush1.bf16.msra.mxu0 0
        %448 = vmatprep.subr.bf16.mxu0 0
        %449 = vmatpush1.bf16.msra.mxu0 0
        %450 = vmatprep.subr.bf16.mxu0 0
        %451 = vmatpush1.bf16.msra.mxu0 0
        %452 = vmatprep.subr.bf16.mxu0 0
        %453 = vmatpush1.bf16.msra.mxu0 0
        %454 = vmatprep.mubr.bf16.mxu0 0
        %455 = vmatmul.mubr.bf16.gmra.mrb[0].mxu0 %v357
        %v456 = vpop.f32.mrb[0].mxu0
        %v457 = vadd.f32 0.0, %v456
        %v458 = vpop.f32.mrb[0].mxu0
        %v459 = vpop.f32.mrb[0].mxu0
        %v460 = vpop.f32.mrb[0].mxu0
        %461 = vdwg.mxu0
        %v462 = vsub.f32 %v243, %v457
        %463 = vst [vmem:[%s241] sm:$0xff] %v462
        %s464 = sand.u32 %s119, 1
        %s465 = scalar_lea.sflag [#allocation4], %s464
        %s466 = sand.u32 %s119, 1
        %s467 = smul.addr %s466, 8
        %s468 = scalar_lea.vmem [#allocation8], %s467
        // Predicated region
        $region49: #{tpu_custom_call.1} parent=35 // pred_check
          %p469 = pneg %p129
        $region50: #{tpu_custom_call.1} parent=35 // pred_check_branch
          %471 = sbr.rel (%p469) target = $region52
        $region51: #{tpu_custom_call.1} parent=35 // pred_region
          %s473 = ssub.s32 128, 128
          %474 = vsyncadd %s465, %s473
          %s475 = smul.addr %s22, 128
          %s476 = scalar_lea.hbm %s4, %s475
          %s478 = sshll.u32 %s468, 4
          %s479 = int_to_ptr.vmem [resolvable:$true] %s478
          %481 = dma.vmem_to_hbm [thread:$0]  %s479, 128, %s476, %s465
        $region52: #{tpu_custom_call.1} parent=35 // pred_fallthru
          _
      $region36: #{tpu_custom_call.1} parent=5 // pred_fallthru
        _
      %p482 = scmp.le.s32.totalorder 2, %s17
      // Predicated region
      $region53: #{tpu_custom_call.1} parent=5 // pred_check
        %p483 = pneg %p482
      $region54: #{tpu_custom_call.1} parent=5 // pred_check_branch
        %485 = sbr.rel (%p483) target = $region56
      $region55: #{tpu_custom_call.1} parent=5 // pred_region
        %s486 = ssub.s32 %s17, 2
        // Predicated region
        $region57: #{tpu_custom_call.1} parent=55 // pred_check
          %p487 = pneg %p135
        $region58: #{tpu_custom_call.1} parent=55 // pred_check_branch
          %489 = sbr.rel (%p487) target = $region60
        $region59: #{tpu_custom_call.1} parent=55 // pred_region
          %s490 = sand.u32 %s120, 1
          %s491 = scalar_lea.sflag [#allocation4], %s490
          %s492 = sand.u32 %s120, 1
          %s493 = smul.addr %s492, 8
          %s494 = scalar_lea.vmem [#allocation8], %s493
          %495 = dma.done %s491, 128
        $region60: #{tpu_custom_call.1} parent=55 // pred_fallthru
          _
      $region56: #{tpu_custom_call.1} parent=5 // pred_fallthru
        _
    $region6: #{tpu_custom_call.1} parent=1 // loop_footer
      %s21 = sadd.s32 1, %s17
    $region7: #{tpu_custom_call.1} parent=1 // loop_footer_branch
      %16 = sbr.rel target = $region3
    $region8: #{tpu_custom_call.1} parent=1 // loop_exit
      _
    %496 = vsyncpa [#allocation3], 1
    %s497 = scalar_lea.sflag [#allocation3], 1
    %498 = vsyncpa %s497, 1
    %499 = vsyncpa [#allocation6], 1
    %500 = vsyncpa [#allocation4], 1
    %s501 = scalar_lea.sflag [#allocation4], 1
    %502 = vsyncpa %s501, 1

</llo_original>
